<compile_context>
chip_gen: v7x
topology: tpu7x:2x2x1
jax: 0.10.0
libtpu: 0.0.40
codegen_flags: <defaults>
</compile_context>

<pallas_src>
import functools

import jax
import jax.numpy as jnp
from jax.experimental import pallas as pl
from jax.experimental.pallas import tpu as pltpu


def _round_up(x, m):
    return -(-x // m) * m


def _conv2d_kernel(x_ref, w_ref, b_ref, o_ref, p_ref, *,
                   block_n, W, KH, KW, OH, OW, Cin, RL):
    """Valid (stride=1, pad=0) 2D conv, channel-major, for `block_n` images.

    x_ref: (block_n, Cin, H*W)        bf16, NCHW flattened (spatial on lanes)
    w_ref: (Cout_pad, K)              bf16, K = KH*KW*Cin,
                                      col (kh*KW + kw)*Cin + ci <-> w[co, ci, kh, kw]
    b_ref: (Cout_pad, 1)              f32
    o_ref: (block_n, Cout_pad, OH*W)  f32, lane q = oh*W + ow (lanes with ow >= OW
                                      and lanes >= R are junk, sliced off in wrapper)
    p_ref: (K, block_n*RL)            bf16 VMEM im2col slab, per-image lane
                                      stride RL = round_up(R, 128)
    """
    R = (OH - 1) * W + OW          # spatial positions covering every valid (oh, ow)

    # --- im2col: tap (kh, kw) of output position q is input position q + kh*W + kw,
    #     i.e. each tap is ONE contiguous lane-range slice of the (Cin, H*W) image.
    for i in range(block_n):       # unrolled; block_n is kept small by the wrapper
        xi = x_ref[i]                                    # (Cin, H*W) bf16, load once
        base = i * RL
        for kh in range(KH):
            for kw in range(KW):
                s = kh * W + kw
                c0 = (kh * KW + kw) * Cin
                p_ref[c0:c0 + Cin, base:base + R] = xi[:, s:s + R]

    # --- one MXU matmul per grid step: (Cout_pad, K) @ (K, block_n*RL),
    #     f32 accumulation; bias broadcast once for the whole block.
    acc = jnp.dot(w_ref[...], p_ref[...],
                  preferred_element_type=jnp.float32)    # (Cout_pad, block_n*RL)
    acc = acc + b_ref[...]                               # (Cout_pad, 1) over lanes

    # --- channel-major lane-dense stores; lanes >= R per image are left untouched
    #     (wrapper slices them off together with the ow >= OW lanes).
    for i in range(block_n):
        o_ref[i, :, :R] = acc[:, i * RL:i * RL + R].astype(o_ref.dtype)


def norm_conv2d(x_nchw, weight_oihw, bias, *, block_n=None):
    """NormConv2d forward with norm='none' (plain Conv2d, stride=1, padding=0)."""
    N, Cin, H, W = x_nchw.shape
    Cout, wcin, KH, KW = weight_oihw.shape
    assert wcin == Cin
    OH, OW = H - KH + 1, W - KW + 1
    K = KH * KW * Cin
    R = (OH - 1) * W + OW
    RL = _round_up(R, 128)            # per-image lane stride in the im2col slab
    Cout_pad = _round_up(Cout, 8)     # sublane-aligned output channels

    # block_n: >= 2 grid steps whenever N >= 2 (pipelining + both v7x TCs), capped
    # so double-buffered in/out blocks + scratch stay well inside VMEM (v7x 64 MiB).
    if block_n is None:
        per_image = (2 * (Cin * H * W * 2 + Cout_pad * OH * W * 4)   # 2x (in + out)
                     + K * RL * 2)                                    # scratch slab
        budget = 24 << 20
        block_n = 1
        if N > 1:
            for d in range(1, N // 2 + 1):
                if N % d == 0 and d * per_image <= budget:
                    block_n = d
    assert N % block_n == 0
    grid = (N // block_n,)

    # ---- one-time layout / dtype prep (cheap reshapes only, no big transposes) ---
    x_cm = x_nchw.astype(jnp.bfloat16).reshape(N, Cin, H * W)
    # weight: OIHW (torch) -> (Cout_pad, KH*KW*Cin) bf16
    w_cm = jnp.zeros((Cout_pad, K), jnp.bfloat16).at[:Cout, :].set(
        jnp.transpose(weight_oihw, (0, 2, 3, 1)).reshape(Cout, K).astype(jnp.bfloat16))
    b_cm = jnp.zeros((Cout_pad, 1), jnp.float32).at[:Cout, 0].set(
        bias.astype(jnp.float32))

    kernel = functools.partial(_conv2d_kernel, block_n=block_n, W=W, KH=KH,
                               KW=KW, OH=OH, OW=OW, Cin=Cin, RL=RL)

    out_cm = pl.pallas_call(
        kernel,
        out_shape=jax.ShapeDtypeStruct((N, Cout_pad, OH * W), jnp.float32),
        grid_spec=pltpu.PrefetchScalarGridSpec(
            num_scalar_prefetch=0,
            grid=grid,
            in_specs=[
                pl.BlockSpec((block_n, Cin, H * W), lambda b: (b, 0, 0)),
                pl.BlockSpec((Cout_pad, K), lambda b: (0, 0)),
                pl.BlockSpec((Cout_pad, 1), lambda b: (0, 0)),
            ],
            out_specs=pl.BlockSpec((block_n, Cout_pad, OH * W),
                                   lambda b: (b, 0, 0)),
            scratch_shapes=[pltpu.VMEM((K, block_n * RL), jnp.bfloat16)],
        ),
        compiler_params=pltpu.CompilerParams(
            dimension_semantics=("parallel",)),
    )(x_cm, w_cm, b_cm)

    # Un-pad channels and drop junk lanes (ow >= OW and trailing lanes >= R).
    out = out_cm[:, :Cout, :].reshape(N, Cout, OH, W)[:, :, :, :OW]
    return out   # norm='none' => Identity after the conv


if __name__ == "__main__":
    # Module config: NormConv2d(4, 8, kernel_size=3)  (stride=1, padding=0, norm='none')
    N, Cin, H, W = 2, 4, 16, 16
    Cout, KH, KW = 8, 3, 3

    key = jax.random.PRNGKey(0)
    kx, kw, kb = jax.random.split(key, 3)
    x = jax.random.normal(kx, (N, Cin, H, W), dtype=jnp.float32)
    # torch Conv2d weight layout: (Cout, Cin, KH, KW)
    weight = 0.1 * jax.random.normal(kw, (Cout, Cin, KH, KW), dtype=jnp.float32)
    bias = 0.1 * jax.random.normal(kb, (Cout,), dtype=jnp.float32)

    out = norm_conv2d(x, weight, bias)
    out = jax.block_until_ready(out)
    assert out.shape == (N, Cout, H - KH + 1, W - KW + 1)

    # Reference: XLA conv on the same bf16-rounded operands (the kernel does a
    # bf16-operand / f32-accumulate MXU matmul).
    x_bf = x.astype(jnp.bfloat16).astype(jnp.float32)
    w_bf = weight.astype(jnp.bfloat16).astype(jnp.float32)
    ref = jax.lax.conv_general_dilated(
        x_bf, w_bf, window_strides=(1, 1), padding="VALID",
        dimension_numbers=("NCHW", "OIHW", "NCHW"),
        preferred_element_type=jnp.float32) + bias[None, :, None, None]
    assert jnp.allclose(out, ref, atol=2e-3, rtol=2e-3)

    print("KERNEL_OK")
</pallas_src>

<mosaic_0001>
module attributes {stable_mosaic.version = 11 : i64} {
  func.func @_conv2d_kernel(%arg0: i32, %arg1: memref<1x4x256xbf16, #tpu.memory_space<vmem>>, %arg2: memref<8x36xbf16, #tpu.memory_space<vmem>>, %arg3: memref<8x1xf32, #tpu.memory_space<vmem>>, %arg4: memref<1x8x224xf32, #tpu.memory_space<vmem>>, %arg5: memref<36x256xbf16, #tpu.memory_space<vmem>>) attributes {dimension_semantics = [#tpu.dimension_semantics<parallel>], iteration_bounds = array<i64: 2>, scalar_prefetch = 0 : i64, scratch_operands = 1 : i64, tpu.core_type = #tpu.core_type<tc>, window_params = [{transform_indices = @transform_0, window_bounds = array<i64: 1, 4, 256>}, {pipeline_mode = #tpu.pipeline_mode<synchronous>, transform_indices = @transform_1, window_bounds = array<i64: 8, 36>}, {pipeline_mode = #tpu.pipeline_mode<synchronous>, transform_indices = @transform_2, window_bounds = array<i64: 8, 1>}, {transform_indices = @transform_3, window_bounds = array<i64: 1, 8, 224>}]} {
    %c0 = arith.constant 0 : index
    %c0_0 = arith.constant 0 : index
    %c0_1 = arith.constant 0 : index
    %0 = vector.load %arg1[%c0, %c0_0, %c0_1] : memref<1x4x256xbf16, #tpu.memory_space<vmem>>, vector<1x4x256xbf16>
    %1 = vector.shape_cast %0 : vector<1x4x256xbf16> to vector<4x256xbf16>
    %2 = vector.extract_strided_slice %1 {offsets = [0, 0], sizes = [4, 222], strides = [1, 1]} : vector<4x256xbf16> to vector<4x222xbf16>
    %c0_2 = arith.constant 0 : index
    %c0_3 = arith.constant 0 : index
    %3 = vector.load %arg5[%c0_2, %c0_3] : memref<36x256xbf16, #tpu.memory_space<vmem>>, vector<4x222xbf16>
    tpu.vector_store %arg5[%c0_2, %c0_3], %2 {strides = array<i32>} : memref<36x256xbf16, #tpu.memory_space<vmem>>, vector<4x222xbf16>,
    %4 = vector.extract_strided_slice %1 {offsets = [0, 1], sizes = [4, 222], strides = [1, 1]} : vector<4x256xbf16> to vector<4x222xbf16>
    %c4 = arith.constant 4 : index
    %c0_4 = arith.constant 0 : index
    %5 = vector.load %arg5[%c4, %c0_4] : memref<36x256xbf16, #tpu.memory_space<vmem>>, vector<4x222xbf16>
    tpu.vector_store %arg5[%c4, %c0_4], %4 {strides = array<i32>} : memref<36x256xbf16, #tpu.memory_space<vmem>>, vector<4x222xbf16>,
    %6 = vector.extract_strided_slice %1 {offsets = [0, 2], sizes = [4, 222], strides = [1, 1]} : vector<4x256xbf16> to vector<4x222xbf16>
    %c8 = arith.constant 8 : index
    %c0_5 = arith.constant 0 : index
    %7 = vector.load %arg5[%c8, %c0_5] : memref<36x256xbf16, #tpu.memory_space<vmem>>, vector<4x222xbf16>
    tpu.vector_store %arg5[%c8, %c0_5], %6 {strides = array<i32>} : memref<36x256xbf16, #tpu.memory_space<vmem>>, vector<4x222xbf16>,
    %8 = vector.extract_strided_slice %1 {offsets = [0, 16], sizes = [4, 222], strides = [1, 1]} : vector<4x256xbf16> to vector<4x222xbf16>
    %c12 = arith.constant 12 : index
    %c0_6 = arith.constant 0 : index
    %9 = vector.load %arg5[%c12, %c0_6] : memref<36x256xbf16, #tpu.memory_space<vmem>>, vector<4x222xbf16>
    tpu.vector_store %arg5[%c12, %c0_6], %8 {strides = array<i32>} : memref<36x256xbf16, #tpu.memory_space<vmem>>, vector<4x222xbf16>,
    %10 = vector.extract_strided_slice %1 {offsets = [0, 17], sizes = [4, 222], strides = [1, 1]} : vector<4x256xbf16> to vector<4x222xbf16>
    %c16 = arith.constant 16 : index
    %c0_7 = arith.constant 0 : index
    %11 = vector.load %arg5[%c16, %c0_7] : memref<36x256xbf16, #tpu.memory_space<vmem>>, vector<4x222xbf16>
    tpu.vector_store %arg5[%c16, %c0_7], %10 {strides = array<i32>} : memref<36x256xbf16, #tpu.memory_space<vmem>>, vector<4x222xbf16>,
    %12 = vector.extract_strided_slice %1 {offsets = [0, 18], sizes = [4, 222], strides = [1, 1]} : vector<4x256xbf16> to vector<4x222xbf16>
    %c20 = arith.constant 20 : index
    %c0_8 = arith.constant 0 : index
    %13 = vector.load %arg5[%c20, %c0_8] : memref<36x256xbf16, #tpu.memory_space<vmem>>, vector<4x222xbf16>
    tpu.vector_store %arg5[%c20, %c0_8], %12 {strides = array<i32>} : memref<36x256xbf16, #tpu.memory_space<vmem>>, vector<4x222xbf16>,
    %14 = vector.extract_strided_slice %1 {offsets = [0, 32], sizes = [4, 222], strides = [1, 1]} : vector<4x256xbf16> to vector<4x222xbf16>
    %c24 = arith.constant 24 : index
    %c0_9 = arith.constant 0 : index
    %15 = vector.load %arg5[%c24, %c0_9] : memref<36x256xbf16, #tpu.memory_space<vmem>>, vector<4x222xbf16>
    tpu.vector_store %arg5[%c24, %c0_9], %14 {strides = array<i32>} : memref<36x256xbf16, #tpu.memory_space<vmem>>, vector<4x222xbf16>,
    %16 = vector.extract_strided_slice %1 {offsets = [0, 33], sizes = [4, 222], strides = [1, 1]} : vector<4x256xbf16> to vector<4x222xbf16>
    %c28 = arith.constant 28 : index
    %c0_10 = arith.constant 0 : index
    %17 = vector.load %arg5[%c28, %c0_10] : memref<36x256xbf16, #tpu.memory_space<vmem>>, vector<4x222xbf16>
    tpu.vector_store %arg5[%c28, %c0_10], %16 {strides = array<i32>} : memref<36x256xbf16, #tpu.memory_space<vmem>>, vector<4x222xbf16>,
    %18 = vector.extract_strided_slice %1 {offsets = [0, 34], sizes = [4, 222], strides = [1, 1]} : vector<4x256xbf16> to vector<4x222xbf16>
    %c32 = arith.constant 32 : index
    %c0_11 = arith.constant 0 : index
    %19 = vector.load %arg5[%c32, %c0_11] : memref<36x256xbf16, #tpu.memory_space<vmem>>, vector<4x222xbf16>
    tpu.vector_store %arg5[%c32, %c0_11], %18 {strides = array<i32>} : memref<36x256xbf16, #tpu.memory_space<vmem>>, vector<4x222xbf16>,
    %c0_12 = arith.constant 0 : index
    %c0_13 = arith.constant 0 : index
    %20 = vector.load %arg2[%c0_12, %c0_13] : memref<8x36xbf16, #tpu.memory_space<vmem>>, vector<8x36xbf16>
    %c0_14 = arith.constant 0 : index
    %c0_15 = arith.constant 0 : index
    %21 = vector.load %arg5[%c0_14, %c0_15] : memref<36x256xbf16, #tpu.memory_space<vmem>>, vector<36x256xbf16>
    %cst = arith.constant dense<0.000000e+00> : vector<8x256xf32>
    %22 = tpu.matmul %20, %21, %cst {dimension_numbers = #tpu.dot_dimension_numbers<[1], [0], [0], [1], [0, 0, 1, 1], [], []>} : vector<8x36xbf16>, vector<36x256xbf16>, vector<8x256xf32> -> vector<8x256xf32>
    %c0_16 = arith.constant 0 : index
    %c0_17 = arith.constant 0 : index
    %23 = vector.load %arg3[%c0_16, %c0_17] : memref<8x1xf32, #tpu.memory_space<vmem>>, vector<8x1xf32>
    %24 = vector.broadcast %23 : vector<8x1xf32> to vector<8x256xf32>
    %25 = arith.addf %22, %24 : vector<8x256xf32>
    %26 = vector.extract_strided_slice %25 {offsets = [0, 0], sizes = [8, 222], strides = [1, 1]} : vector<8x256xf32> to vector<8x222xf32>
    %c0_18 = arith.constant 0 : index
    %c0_19 = arith.constant 0 : index
    %c0_20 = arith.constant 0 : index
    %27 = vector.load %arg4[%c0_18, %c0_19, %c0_20] : memref<1x8x224xf32, #tpu.memory_space<vmem>>, vector<1x8x222xf32>
    %28 = vector.shape_cast %27 : vector<1x8x222xf32> to vector<8x222xf32>
    %29 = vector.shape_cast %26 : vector<8x222xf32> to vector<1x8x222xf32>
    tpu.vector_store %arg4[%c0_18, %c0_19, %c0_20], %29 {strides = array<i32>} : memref<1x8x224xf32, #tpu.memory_space<vmem>>, vector<1x8x222xf32>,
    return
  }
  func.func @transform_0(%arg0: i32) -> (i32, i32, i32) {
    %c0_i32 = arith.constant 0 : i32
    %c0_i32_0 = arith.constant 0 : i32
    %c0_i32_1 = arith.constant 0 : i32
    return %arg0, %c0_i32, %c0_i32_0 : i32, i32, i32
  }
  func.func @transform_1(%arg0: i32) -> (i32, i32) {
    %c0_i32 = arith.constant 0 : i32
    %c0_i32_0 = arith.constant 0 : i32
    %c0_i32_1 = arith.constant 0 : i32
    return %c0_i32, %c0_i32_0 : i32, i32
  }
  func.func @transform_2(%arg0: i32) -> (i32, i32) {
    %c0_i32 = arith.constant 0 : i32
    %c0_i32_0 = arith.constant 0 : i32
    %c0_i32_1 = arith.constant 0 : i32
    return %c0_i32, %c0_i32_0 : i32, i32
  }
  func.func @transform_3(%arg0: i32) -> (i32, i32, i32) {
    %c0_i32 = arith.constant 0 : i32
    %c0_i32_0 = arith.constant 0 : i32
    %c0_i32_1 = arith.constant 0 : i32
    return %arg0, %c0_i32, %c0_i32_0 : i32, i32, i32
  }
}

</mosaic_0001>

<llo_original>
// kernel: tpu_custom_call.1
$region0: #{tpu_custom_call.1}
  #allocation0 [shape = 'u32[]', space=smem, size = 0x4, offset = 0x4, fixed_abs, tag = 'smem constant byte address 0x4 - core index']
  #allocation1 [shape = 'u32[144,128]{1,0:T(1,128)}', space=vmem, size = 0x12000, scoped, tag = 'internal scratch']
  #allocation2 [shape = 'bf16[36,256]{1,0:T(8,128)(2,1)}', space=vmem, size = 0x5000, scoped, tag = 'scratch operand']
  %s0 = inlined_call_operand.vmem [shape: bf16[2,4,256], index: 0, kind: input, shape index: {}]
  %s1 = inlined_call_operand.vmem [shape: bf16[8,36], index: 1, kind: input, shape index: {}]
  %s2 = inlined_call_operand.vmem [shape: f32[8,1], index: 2, kind: input, shape index: {}]
  %s3 = inlined_call_operand.hbm [shape: f32[2,8,224], index: 3, kind: output, shape index: {}]
  %s4 = sld [smem:[#allocation0]]
  $region45: #{tpu_custom_call.1} parent=0
    _
  %s6 = ssub.s32 1, %s4
  %s7 = scalar_select 0, %s6, %s4
  $region1: #{tpu_custom_call.1} parent=0
    #allocation3 [shape = 'u8[16384]{0}', space=vmem, size = 0x4000, scoped, tag = 'output window, operand 0']
    #allocation4 [shape = 's32[2]{0}', space=sflag, size = 0x8, scoped, tag = 'scoped memory for tpu_custom_call.1']
    %8 = vsyncpa [#allocation4], 0
    %s9 = scalar_lea.sflag [#allocation4], 1
    %10 = vsyncpa %s9, 0
    loop: start=0, step=1, limit=4
    $region2: #{tpu_custom_call.1} parent=1 // loop_pre_header
      _
    $region3: #{tpu_custom_call.1} parent=1 // loop_header
      %s12 = sphi 0, %s16
      %p13 = scmp.ge.s32.totalorder %s12, 4
      %s22 = sphi 0, %s24
      %s25 = sphi 0, %s22
      %s26 = sphi 0, %s25
      %s42 = sphi 0, %s26
      %s46 = sphi 0, %s46
      %s48 = sphi 0, %s46
      %s49 = sphi 0, %s48
      %s63 = sphi 0, %s49
      %s67 = sphi 0, %s67
      %s69 = sphi 0, %s67
      %s70 = sphi 0, %s69
      %s84 = sphi 0, %s70
      %s90 = sphi 0, %s92
      %s93 = sphi 0, %s90
      %s94 = sphi 0, %s93
      %s110 = sphi 0, %s94
    $region4: #{tpu_custom_call.1} parent=1 // loop_header_branch
      %15 = sbr.rel (%p13) target = $region8
    $region5: #{tpu_custom_call.1} parent=1 // loop_body
      %s17 = ssub.s32 %s12, 1
      %s18 = ssub.s32 %s12, 2
      %s19 = sadd.s32 %s12, 1
      %s20 = ssub.s32 %s12, %s19
      %p21 = scmp.eq.s32.totalorder %s20, 0
      %s23 = sadd.s32 %s22, 1
      %s24 = scalar_select %p21, %s22, %s23
      %p27 = pneg %p21
      %p28 = scmp.eq.s32.totalorder %s12, 1
      %p29 = por %p27, %p28
      %p30 = scmp.ne.s32.totalorder %s22, %s25
      %p31 = scmp.eq.s32.totalorder %s12, 0
      %p32 = por %p30, %p31
      %p33 = scmp.ne.s32.totalorder %s22, %s25
      %p34 = scmp.eq.s32.totalorder %s17, 1
      %p35 = por %p33, %p34
      %p36 = scmp.ne.s32.totalorder %s25, %s26
      %p37 = scmp.eq.s32.totalorder %s17, 0
      %p38 = por %p36, %p37
      %p39 = scmp.ne.s32.totalorder %s25, %s26
      %p40 = scmp.eq.s32.totalorder %s18, 1
      %p41 = por %p39, %p40
      %p43 = scmp.ne.s32.totalorder %s26, %s42
      %p44 = scmp.eq.s32.totalorder %s18, 0
      %p45 = por %p43, %p44
      %s47 = sadd.s32 %s46, 1
      %p50 = scmp.eq.s32.totalorder %s12, 1
      %p51 = scmp.ne.s32.totalorder %s46, %s48
      %p52 = scmp.eq.s32.totalorder %s12, 0
      %p53 = por %p51, %p52
      %p54 = scmp.ne.s32.totalorder %s46, %s48
      %p55 = scmp.eq.s32.totalorder %s17, 1
      %p56 = por %p54, %p55
      %p57 = scmp.ne.s32.totalorder %s48, %s49
      %p58 = scmp.eq.s32.totalorder %s17, 0
      %p59 = por %p57, %p58
      %p60 = scmp.ne.s32.totalorder %s48, %s49
      %p61 = scmp.eq.s32.totalorder %s18, 1
      %p62 = por %p60, %p61
      %p64 = scmp.ne.s32.totalorder %s49, %s63
      %p65 = scmp.eq.s32.totalorder %s18, 0
      %p66 = por %p64, %p65
      %s68 = sadd.s32 %s67, 1
      %p71 = scmp.eq.s32.totalorder %s12, 1
      %p72 = scmp.ne.s32.totalorder %s67, %s69
      %p73 = scmp.eq.s32.totalorder %s12, 0
      %p74 = por %p72, %p73
      %p75 = scmp.ne.s32.totalorder %s67, %s69
      %p76 = scmp.eq.s32.totalorder %s17, 1
      %p77 = por %p75, %p76
      %p78 = scmp.ne.s32.totalorder %s69, %s70
      %p79 = scmp.eq.s32.totalorder %s17, 0
      %p80 = por %p78, %p79
      %p81 = scmp.ne.s32.totalorder %s69, %s70
      %p82 = scmp.eq.s32.totalorder %s18, 1
      %p83 = por %p81, %p82
      %p85 = scmp.ne.s32.totalorder %s70, %s84
      %p86 = scmp.eq.s32.totalorder %s18, 0
      %p87 = por %p85, %p86
      %s88 = ssub.s32 %s12, %s19
      %p89 = scmp.eq.s32.totalorder %s88, 0
      %s91 = sadd.s32 %s90, 1
      %s92 = scalar_select %p89, %s90, %s91
      %p95 = pneg %p89
      %p96 = scmp.eq.s32.totalorder %s12, 1
      %p97 = por %p95, %p96
      %p98 = scmp.ne.s32.totalorder %s90, %s93
      %p99 = scmp.eq.s32.totalorder %s12, 0
      %p100 = por %p98, %p99
      %p101 = scmp.ne.s32.totalorder %s90, %s93
      %p102 = scmp.eq.s32.totalorder %s17, 1
      %p103 = por %p101, %p102
      %p104 = scmp.ne.s32.totalorder %s93, %s94
      %p105 = scmp.eq.s32.totalorder %s17, 0
      %p106 = por %p104, %p105
      %p107 = scmp.ne.s32.totalorder %s93, %s94
      %p108 = scmp.eq.s32.totalorder %s18, 1
      %p109 = por %p107, %p108
      %p111 = scmp.ne.s32.totalorder %s94, %s110
      %p112 = scmp.eq.s32.totalorder %s18, 0
      %p113 = por %p111, %p112
      %p114 = scmp.le.s32.totalorder 1, %s12
      %p115 = scmp.lt.s32.totalorder %s12, 3
      %p116 = pnand %p114, %p115
      %p117 = pneg %p116
      // Predicated region
      $region9: #{tpu_custom_call.1} parent=5 // pred_check
        _
      $region10: #{tpu_custom_call.1} parent=5 // pred_check_branch
        %119 = sbr.rel (%p116) target = $region12
      $region11: #{tpu_custom_call.1} parent=5 // pred_region
        %s120 = ssub.s32 %s12, 1
        // Predicated region
        $region13: #{tpu_custom_call.1} parent=11 // pred_check
          %p121 = pneg %p59
        $region14: #{tpu_custom_call.1} parent=11 // pred_check_branch
          %123 = sbr.rel (%p121) target = $region16
        $region15: #{tpu_custom_call.1} parent=11 // pred_region
          _
        $region16: #{tpu_custom_call.1} parent=11 // pred_fallthru
          _
        // Predicated region
        $region17: #{tpu_custom_call.1} parent=11 // pred_check
          %p124 = pneg %p80
        $region18: #{tpu_custom_call.1} parent=11 // pred_check_branch
          %126 = sbr.rel (%p124) target = $region20
        $region19: #{tpu_custom_call.1} parent=11 // pred_region
          _
        $region20: #{tpu_custom_call.1} parent=11 // pred_fallthru
          _
      $region12: #{tpu_custom_call.1} parent=5 // pred_fallthru
        _
      %p127 = scmp.lt.s32.totalorder %s12, 2
      // Predicated region
      $region21: #{tpu_custom_call.1} parent=5 // pred_check
        %p128 = pneg %p127
      $region22: #{tpu_custom_call.1} parent=5 // pred_check_branch
        %130 = sbr.rel (%p128) target = $region24
      $region23: #{tpu_custom_call.1} parent=5 // pred_region
        // Predicated region
        $region25: #{tpu_custom_call.1} parent=23 // pred_check
          %p131 = pneg %p32
        $region26: #{tpu_custom_call.1} parent=23 // pred_check_branch
          %133 = sbr.rel (%p131) target = $region28
        $region27: #{tpu_custom_call.1} parent=23 // pred_region
          %p134 = scmp.lt.s32.totalorder %s12, 1
          %s135 = scalar_select %p134, %s12, 1
          %s136 = smul.addr %s135, 2
          %s137 = smul.addr %s136, 2
          %s138 = scalar_lea.vmem %s0, %s137
        $region28: #{tpu_custom_call.1} parent=23 // pred_fallthru
          _
      $region24: #{tpu_custom_call.1} parent=5 // pred_fallthru
        _
      %p139 = scmp.le.s32.totalorder 1, %s12
      %p140 = scmp.lt.s32.totalorder %s12, 3
      %p141 = pnand %p139, %p140
      %p142 = pneg %p141
      // Predicated region
      $region29: #{tpu_custom_call.1} parent=5 // pred_check
        _
      $region30: #{tpu_custom_call.1} parent=5 // pred_check_branch
        %144 = sbr.rel (%p141) target = $region32
      $region31: #{tpu_custom_call.1} parent=5 // pred_region
        %s145 = ssub.s32 %s12, 1
        %p146 = scmp.lt.s32.totalorder %s17, 1
        %s147 = scalar_select %p146, %s17, 1
        %s148 = smul.addr %s147, 2
        %s149 = smul.addr %s148, 2
        %s150 = scalar_lea.vmem %s0, %s149
        %p151 = pneg %p38
        %p152 = pneg %p35
        %p153 = pneg %p59
        %p154 = pneg %p56
        %p155 = pneg %p80
        %p156 = pneg %p77
        %p157 = pneg %p106
        %p158 = pneg %p103
        %s159 = sand.u32 %s93, 1
        %s160 = scalar_lea.sflag [#allocation4], %s159
        %s161 = sand.u32 %s93, 1
        %s162 = smul.addr %s161, 16
        %s163 = scalar_lea.vmem [#allocation3], %s162
        %p164 = scmp.lt.s32.totalorder %s17, 1
        %s165 = scalar_select %p164, %s17, 1
        %s166 = smul.addr %s165, 2
        %s167 = smul.addr %s166, 2
        %s168 = scalar_lea.vmem %s0, %s167
        %v170 = vld [vmem:[%s168] sm:$0xf]
        %v173 = vunpack.c.l.s4 1983009808
        %v174 = vunpack.c.0.s8 %v173
        %v175 = vlaneseq
        %v176 = vshrl.u32 %v175, 7
        %v177 = vsub.s32 %v174, %v176
        %v178 = vrot.slane %v170, %v177
        %vm180 = vcmask 1041408
        %vm181 = vcmask 766980
        %vm182 = vmor %vm181, %vm180
        %183 = vst.msk [vmem:[#allocation2] sm:$0x33] %vm182, %v178
        %v184 = vcombine.low %v170, %v170
        %v186 = vunpack.c.l.s4 1983009808
        %v187 = vunpack.c.0.s8 %v186
        %v188 = vlaneseq
        %v189 = vshrl.u32 %v188, 7
        %v190 = vsub.s32 %v187, %v189
        %v191 = vrot.slane %v184, %v190
        %192 = vrot.lane.b32.xlu0 %v191, 127
        %v193 = vpop.permute.xlu0 %192
        %v194 = vrot.slane %v193, 4
        %vm195 = vcmask 1039360
        %v196 = vsel %vm195, %v193, %v194
        %vm198 = vcmask 1043458
        %vm199 = vcmask 769030
        %vm200 = vmor %vm199, %vm198
        %201 = vst.msk [vmem:[#allocation2] sm:$0xcc] %vm200, %v196
        %202 = vrot.lane.b32.xlu0 %v178, 126
        %v203 = vpop.permute.xlu0 %202
        %v204 = vrot.slane %v203, 4
        %vm205 = vcmask 1031168
        %v206 = vsel %vm205, %v203, %v204
        %208 = vst.msk [vmem:[#allocation2 + $0x8] sm:$0x33] %vm182, %v206
        %209 = vrot.lane.b32.xlu0 %v191, 112
        %v210 = vpop.permute.xlu0 %209
        %v211 = vrot.slane %v210, 4
        %vm212 = vcmask 916480
        %v213 = vsel %vm212, %v210, %v211
        %215 = vst.msk [vmem:[#allocation2 + $0x8] sm:$0xcc] %vm200, %v213
        %216 = vrot.lane.b32.xlu0 %v178, 111
        %v217 = vpop.permute.xlu0 %216
        %v218 = vrot.slane %v217, 4
        %vm219 = vcmask 908288
        %v220 = vsel %vm219, %v217, %v218
        %222 = vst.msk [vmem:[#allocation2 + $0x10] sm:$0x33] %vm182, %v220
        %223 = vrot.lane.b32.xlu0 %v191, 110
        %v224 = vpop.permute.xlu0 %223
        %v225 = vrot.slane %v224, 4
        %vm226 = vcmask 900096
        %v227 = vsel %vm226, %v224, %v225
        %229 = vst.msk [vmem:[#allocation2 + $0x10] sm:$0xcc] %vm200, %v227
        %230 = vrot.lane.b32.xlu0 %v178, 96
        %v231 = vpop.permute.xlu0 %230
        %v232 = vrot.slane %v231, 4
        %vm233 = vcmask 785408
        %v234 = vsel %vm233, %v231, %v232
        %236 = vst.msk [vmem:[#allocation2 + $0x18] sm:$0x33] %vm182, %v234
        %237 = vrot.lane.b32.xlu0 %v191, 95
        %v238 = vpop.permute.xlu0 %237
        %v239 = vrot.slane %v238, 4
        %vm240 = vcmask 777216
        %v241 = vsel %vm240, %v238, %v239
        %243 = vst.msk [vmem:[#allocation2 + $0x18] sm:$0xcc] %vm200, %v241
        %244 = vrot.lane.b32.xlu0 %v178, 94
        %v245 = vpop.permute.xlu0 %244
        %v246 = vrot.slane %v245, 4
        %vm247 = vcmask 769024
        %v248 = vsel %vm247, %v245, %v246
        %250 = vst.msk [vmem:[#allocation2 + $0x20] sm:$0x33] %vm182, %v248
        %v251 = vld [vmem:[%s1] sm:$0xf]
        %v252 = vld [vmem:[#allocation2] sm:$0xff]
        %v253 = vld [vmem:[#allocation2 + $0x8] sm:$0xff]
        %v254 = vld [vmem:[#allocation2 + $0x10] sm:$0xff]
        %v255 = vld [vmem:[#allocation2 + $0x18] sm:$0xff]
        %v256 = vld [vmem:[#allocation2 + $0x20] sm:$0x33]
        %v257 = vld [vmem:[%s2] sm:$0xff]
        %259 = vset.pattern.permute.xlu0 0
        %260 = vperm.xlu0 %259, %v257
        %v261 = vpop.permute.xlu0 %260
        %v268 = vunpack.c.l.b16 %v252
        %v269 = vunpack.c.h.b16 %v252
        %v270 = vunpack.c.l.b16 %v253
        %v271 = vunpack.c.h.b16 %v253
        %v272 = vunpack.c.l.b16 %v254
        %v273 = vunpack.c.h.b16 %v254
        %v274 = vunpack.c.l.b16 %v255
        %v275 = vunpack.c.h.b16 %v255
        %v276 = vunpack.c.l.b16 %v256
        %v277 = vunpack.c.h.b16 %v256
        %v278 = vpack.c.b16 %v270, %v268
        %v279 = vpack.c.b16 %v271, %v269
        %v280 = vpack.c.b16 %v274, %v272
        %v281 = vpack.c.b16 %v275, %v273
        %v282 = vpack.c.b16 %v276, %v276
        %v283 = vpack.c.b16 %v277, %v277
        %vm288 = vcmask 293888
        %v290 = vsel %vm288, %v251, 0
        %v293 = vsel %vm180, %v282, 0
        %v296 = vsel %vm180, %v283, 0
        %298 = vmatprep.subr.bf16.mxu0 %v279
        %299 = vmatpush1.bf16.msra.mxu0 %v278
        %300 = vmatprep.subr.bf16.mxu0 %v281
        %301 = vmatpush1.bf16.msra.mxu0 %v280
        %302 = vmatprep.subr.bf16.mxu0 %v296
        %303 = vmatpush1.bf16.msra.mxu0 %v293
        %304 = vmatprep.subr.bf16.mxu0 0
        %305 = vmatpush1.bf16.msra.mxu0 0
        %306 = vmatprep.subr.bf16.mxu0 0
        %307 = vmatpush1.bf16.msra.mxu0 0
        %308 = vmatprep.subr.bf16.mxu0 0
        %309 = vmatpush1.bf16.msra.mxu0 0
        %310 = vmatprep.subr.bf16.mxu0 0
        %311 = vmatpush1.bf16.msra.mxu0 0
        %312 = vmatprep.subr.bf16.mxu0 0
        %313 = vmatpush1.bf16.msra.mxu0 0
        %314 = vmatprep.subr.bf16.mxu0 0
        %315 = vmatpush1.bf16.msra.mxu0 0
        %316 = vmatprep.subr.bf16.mxu0 0
        %317 = vmatpush1.bf16.msra.mxu0 0
        %318 = vmatprep.subr.bf16.mxu0 0
        %319 = vmatpush1.bf16.msra.mxu0 0
        %320 = vmatprep.subr.bf16.mxu0 0
        %321 = vmatpush1.bf16.msra.mxu0 0
        %322 = vmatprep.subr.bf16.mxu0 0
        %323 = vmatpush1.bf16.msra.mxu0 0
        %324 = vmatprep.subr.bf16.mxu0 0
        %325 = vmatpush1.bf16.msra.mxu0 0
        %326 = vmatprep.subr.bf16.mxu0 0
        %327 = vmatpush1.bf16.msra.mxu0 0
        %328 = vmatprep.subr.bf16.mxu0 0
        %329 = vmatpush1.bf16.msra.mxu0 0
        %330 = vmatprep.mubr.bf16.mxu0 0
        %331 = vmatmul.mubr.bf16.gmra.mrb[0].mxu0 %v290
        %v332 = vpop.f32.mrb[0].mxu0
        %v333 = vadd.f32 %v261, %v332
        %v334 = vpop.f32.mrb[0].mxu0
        %v335 = vadd.f32 %v261, %v334
        %v336 = vpop.f32.mrb[0].mxu0
        %v337 = vpop.f32.mrb[0].mxu0
        %338 = vdwg.mxu0
        %339 = vst [vmem:[%s163] sm:$0xff] %v333
        %vm340 = vcmask 769024
        %341 = vst.msk [vmem:[%s163 + $0x8] sm:$0xff] %vm340, %v335
        %s342 = sand.u32 %s93, 1
        %s343 = scalar_lea.sflag [#allocation4], %s342
        %s344 = sand.u32 %s93, 1
        %s345 = smul.addr %s344, 16
        %s346 = scalar_lea.vmem [#allocation3], %s345
        // Predicated region
        $region33: #{tpu_custom_call.1} parent=31 // pred_check
          %p347 = pneg %p103
        $region34: #{tpu_custom_call.1} parent=31 // pred_check_branch
          %349 = sbr.rel (%p347) target = $region36
        $region35: #{tpu_custom_call.1} parent=31 // pred_region
          %s351 = ssub.s32 256, 256
          %352 = vsyncadd %s343, %s351
          %s353 = smul.addr %s17, 2
          %s354 = smul.addr %s353, 128
          %s355 = scalar_lea.hbm %s3, %s354
          %s357 = sshll.u32 %s346, 4
          %s358 = int_to_ptr.vmem [resolvable:$true] %s357
          %360 = dma.vmem_to_hbm [thread:$0]  %s358, 256, %s355, %s343
        $region36: #{tpu_custom_call.1} parent=31 // pred_fallthru
          _
      $region32: #{tpu_custom_call.1} parent=5 // pred_fallthru
        _
      %p361 = scmp.le.s32.totalorder 2, %s12
      // Predicated region
      $region37: #{tpu_custom_call.1} parent=5 // pred_check
        %p362 = pneg %p361
      $region38: #{tpu_custom_call.1} parent=5 // pred_check_branch
        %364 = sbr.rel (%p362) target = $region40
      $region39: #{tpu_custom_call.1} parent=5 // pred_region
        %s365 = ssub.s32 %s12, 2
        // Predicated region
        $region41: #{tpu_custom_call.1} parent=39 // pred_check
          %p366 = pneg %p109
        $region42: #{tpu_custom_call.1} parent=39 // pred_check_branch
          %368 = sbr.rel (%p366) target = $region44
        $region43: #{tpu_custom_call.1} parent=39 // pred_region
          %s369 = sand.u32 %s94, 1
          %s370 = scalar_lea.sflag [#allocation4], %s369
          %s371 = sand.u32 %s94, 1
          %s372 = smul.addr %s371, 16
          %s373 = scalar_lea.vmem [#allocation3], %s372
          %374 = dma.done %s370, 256
        $region44: #{tpu_custom_call.1} parent=39 // pred_fallthru
          _
      $region40: #{tpu_custom_call.1} parent=5 // pred_fallthru
        _
    $region6: #{tpu_custom_call.1} parent=1 // loop_footer
      %s16 = sadd.s32 1, %s12
    $region7: #{tpu_custom_call.1} parent=1 // loop_footer_branch
      %11 = sbr.rel target = $region3
    $region8: #{tpu_custom_call.1} parent=1 // loop_exit
      _
    %375 = vsyncpa [#allocation4], 1
    %s376 = scalar_lea.sflag [#allocation4], 1
    %377 = vsyncpa %s376, 1

</llo_original>
